<compile_context>
chip_gen: v7x
topology: tpu7x:2x2x1
jax: 0.10.0
libtpu: 0.0.40
codegen_flags: <defaults>
</compile_context>

<pallas_src>
import jax
import jax.numpy as jnp
from jax.experimental import pallas as pl
from jax.experimental.pallas import tpu as pltpu


def _dma_identity_kernel(x_hbm, o_hbm, sem):
    # One direct HBM -> HBM DMA for the whole array; no VMEM staging.
    cp = pltpu.make_async_copy(x_hbm, o_hbm, sem)
    cp.start()
    cp.wait()


def identity_map_pallas(x: jax.Array) -> jax.Array:
    """Materializing identity: copies x into a fresh buffer with a single
    HBM->HBM DMA (no VMEM round trip, no grid / tiling overhead)."""
    return pl.pallas_call(
        _dma_identity_kernel,
        out_shape=jax.ShapeDtypeStruct(x.shape, x.dtype),
        in_specs=[pl.BlockSpec(memory_space=pl.ANY)],
        out_specs=pl.BlockSpec(memory_space=pl.ANY),
        scratch_shapes=[pltpu.SemaphoreType.DMA],
    )(x)


def identity_map(x: jax.Array, *args, **kwargs) -> jax.Array:
    """Pallas-side equivalent of IdentityMap.forward(x) -> x.

    The identity projector has no compute, so the fastest implementation is to
    return the input unchanged (zero HBM traffic). Use `identity_map_pallas(x)`
    only when a freshly-materialized output buffer is required.
    """
    return x


def identity_map_config():
    # Mirrors IdentityMap.config property.
    return {"mm_projector_type": "identity"}


if __name__ == "__main__":
    key = jax.random.PRNGKey(0)
    # Small shape consistent with a multimodal projector input: [batch, seq, hidden]
    x = jax.random.normal(key, (2, 8, 32), dtype=jnp.float32)

    # Module-equivalent forward: pure passthrough (the real optimization).
    y = identity_map(x, "extra_positional_arg", some_kwarg=123)
    jax.block_until_ready(y)
    assert y.shape == x.shape and y.dtype == x.dtype
    assert bool(jnp.array_equal(y, x))

    # Pallas kernel path: single HBM->HBM DMA copy into a fresh buffer.
    y_copy = identity_map_pallas(x)
    jax.block_until_ready(y_copy)
    assert y_copy.shape == x.shape and y_copy.dtype == x.dtype
    assert bool(jnp.array_equal(y_copy, x))

    # Also exercise the jitted path to confirm it lowers cleanly inside XLA.
    y_jit = jax.jit(identity_map_pallas)(x)
    jax.block_until_ready(y_jit)
    assert bool(jnp.array_equal(y_jit, x))

    assert identity_map_config() == {"mm_projector_type": "identity"}

    print("KERNEL_OK")
</pallas_src>

<mosaic_0001>
module attributes {stable_mosaic.version = 11 : i64} {
  func.func @_dma_identity_kernel(%arg0: memref<2x8x32xf32, #tpu.memory_space<any>>, %arg1: memref<2x8x32xf32, #tpu.memory_space<any>>, %arg2: memref<!tpu.dma_semaphore, #tpu.memory_space<semaphore_mem>>) attributes {dimension_semantics = [], scalar_prefetch = 0 : i64, scratch_operands = 1 : i64, tpu.core_type = #tpu.core_type<tc>} {
    tpu.enqueue_dma source(%arg0 : memref<2x8x32xf32, #tpu.memory_space<any>>) target(%arg1 : memref<2x8x32xf32, #tpu.memory_space<any>>) target_semaphore(%arg2 : memref<!tpu.dma_semaphore, #tpu.memory_space<semaphore_mem>>)
    tpu.wait_dma2 semaphore(%arg2 : memref<!tpu.dma_semaphore, #tpu.memory_space<semaphore_mem>>) src(%arg0 : memref<2x8x32xf32, #tpu.memory_space<any>>) dst(%arg1 : memref<2x8x32xf32, #tpu.memory_space<any>>)
    return
  }
}

</mosaic_0001>

<llo_original>
// kernel: tpu_custom_call.1
$region0: #{tpu_custom_call.1}
  #allocation0 [shape = 'u32[]', space=smem, size = 0x4, offset = 0x4, fixed_abs, tag = 'smem constant byte address 0x4 - core index']
  #allocation1 [shape = 'u32[144,128]{1,0:T(1,128)}', space=vmem, size = 0x12000, scoped, tag = 'internal scratch']
  #allocation2 [shape = 's32[1]{0}', space=sflag, size = 0x4, scoped, tag = 'scratch operand']
  #allocation3 [shape = 's32[]', space=sflag, size = 0x4, offset = 0, fixed_abs, tag = 'sflag constant byte address 0x0 - dummy sync flag']
  #allocation4 [shape = 'u32[0]{0}', space=smem, size = 0, offset = 0, fixed_abs, tag = 'smem constant byte address 0x0 - null']
  %s0 = inlined_call_operand.hbm [shape: f32[2,8,32], index: 0, kind: input, shape index: {}]
  %s1 = inlined_call_operand.hbm [shape: f32[2,8,32], index: 1, kind: output, shape index: {}]
  %s2 = sld [smem:[#allocation0]]
  $region2: #{tpu_custom_call.1} parent=0
    _
  %s4 = ssub.s32 1, %s2
  %s5 = scalar_select 0, %s4, %s2
  %s7 = sshll.u32 1, 14
  %s8 = sxor.u32 4294967295, %s7
  %s11 = sshll.u32 3, 24
  %s12 = sxor.u32 4294967295, %s11
  %s13 = sand.u32 0, %s12
  %s15 = sor.u32 %s13, 0
  %18 = dma.general %s0, 256, %s1, [#allocation2], [#allocation3], [#allocation4], %s15, 0
  %s19 = smul.u32 2, 8
  %s20 = smul.u32 %s19, 1
  %s21 = sshll.u32 %s20, 4
  %22 = dma.done [#allocation2], %s21
  %23 = vsyncmov [#allocation2]
  %s24 = vpop.sfrf %23
  %p25 = scmp.eq.s32.totalorder %s24, 0
  %p26 = pneg %p25
  %28 = shalt.err (%p26)

</llo_original>
